<compile_context>
chip_gen: v7x
topology: tpu7x:2x2x1
jax: 0.10.0
libtpu: 0.0.40
codegen_flags: <defaults>
</compile_context>

<pallas_src>
import functools

import jax
import jax.numpy as jnp
from jax.experimental import pallas as pl
from jax.experimental.pallas import tpu as pltpu


def _round_up(x, m):
    return ((x + m - 1) // m) * m


@functools.lru_cache(maxsize=1)
def _chip_config():
    """Per-generation VMEM budgets.  v5e/v6e: 128 MiB VMEM, 1 TC/chip.  v7x: 64 MiB/TC, 2 TCs."""
    try:
        cap = int(pltpu.get_tpu_info().vmem_capacity_bytes)
    except Exception:
        cap = 64 << 20                               # conservative default (v7x-like)
    if cap >= (100 << 20):                           # v5e / v6e
        return {"work_budget": 48 << 20, "limit_cap": 96 << 20, "two_tc": False}
    return {"work_budget": 20 << 20, "limit_cap": 44 << 20, "two_tc": True}


# -----------------------------------------------------------------------------
# Fused path: writes the NCDHW output layout directly (no post-kernel transpose)
# -----------------------------------------------------------------------------
def _fused_kernel(x_ref, w_ref, b_ref, o_ref, *, H, W, d_tile):
    # x_ref: (1, Cin, d_tile*HW)    input slab for (n, d-tile): channels x flattened spatial
    # w_ref: (1, 8*co_t, Cin)       tap-major rows within the co group, already (co, ci)
    # b_ref: (co_t, 1)
    # o_ref: (1, co_t, d_tile*8*HW) one (n, co-tile, d-tile) block of the NCDHW-layout output
    hw = H * W
    co_t = o_ref.shape[1]
    xs = x_ref[0]                                     # (Cin, d_tile*HW)
    wmat = w_ref[0]                                   # (8*co_t, Cin)

    # Single MXU contraction per block: all 8 taps + full depth tile at once, f32 accumulation.
    p = jnp.dot(wmat, xs, preferred_element_type=jnp.float32)   # (8*co_t, d_tile*HW)

    # 2x2x2 tap interleave into the NCDHW lane order, done on-chip in VMEM.
    # TODO(synk): if Mosaic relayout copies from this stack/reshape chain ever become the
    # saturated slot on v7x (3.2 TB/s HBM), replace with parity-select + pltpu.roll and
    # bf16 pair-packing via pltpu.bitcast for a cheaper lane interleave.
    halves = []
    for kd in range(2):
        rows = []
        for kh in range(2):
            cols = []
            for kw in range(2):
                t = kd * 4 + kh * 2 + kw
                cols.append(p[t * co_t:(t + 1) * co_t].reshape(co_t, d_tile, H, W))
            # lane index within a row: 2*w + kw
            rows.append(jnp.stack(cols, axis=-1).reshape(co_t, d_tile, H, 2 * W))
        # lane index within a depth slice: h*4W + kh*2W + 2*w + kw
        halves.append(jnp.stack(rows, axis=3).reshape(co_t, d_tile, 4 * hw))
    # lane index within the block: d*8HW + kd*4HW + h*4W + kh*2W + 2*w + kw  == NCDHW order
    out = jnp.stack(halves, axis=2).reshape(co_t, d_tile * 8 * hw)
    out = out + b_ref[...].astype(jnp.float32)        # one bias broadcast per block
    o_ref[0, :, :] = out.astype(o_ref.dtype)          # single lane-dense full-block store


def _fused_live_bytes(cin, hw, co_t, d_tile, itemsize):
    out_e = co_t * d_tile * 8 * hw
    return (out_e * (2 * itemsize + 16)               # 2x out block + f32 matmul/interleave temps
            + 2 * cin * d_tile * hw * itemsize        # 2x input block
            + 2 * 8 * co_t * cin * itemsize           # 2x weight block
            + 2 * co_t * 128 * itemsize)              # 2x bias block (lane-padded)


def _fused_tiles(x_shape, cout, itemsize, work_budget, two_tc):
    """Pick (co_t, d_tile) for the fused path, or None if no clean tiling exists."""
    N, Cin, D, H, W = x_shape
    hw = H * W
    align = 16 if itemsize < 4 else 8                 # bf16 sublane packing is (16, 128)

    # d_tile must keep block last dims lane-dense (multiple of 128) or span the full axis.
    d_cands = [d for d in range(1, D + 1)
               if D % d == 0 and (d == D or (d * hw) % 128 == 0)]
    if not d_cands:
        return None

    def co_cands():
        seen = {cout}
        yield cout                                    # full Cout: always a legal full-dim block
        c = (cout // align) * align
        while c >= align:
            if cout % c == 0 and c not in seen:
                seen.add(c)
                yield c
            c -= align

    for co_t in co_cands():
        fits = [d for d in d_cands
                if _fused_live_bytes(Cin, hw, co_t, d, itemsize) <= work_budget]
        if not fits:
            continue
        d_tile = max(fits)
        if two_tc and N * (D // d_tile) * (cout // co_t) < 2:
            halves = [d for d in fits if D // d >= 2]
            if halves:
                d_tile = max(halves)                  # >= 2 grid steps so both TCs get work
        return co_t, d_tile
    return None


def _deconv_fused(x, weight, bias, *, co_t, d_tile):
    N, Cin, D, H, W = x.shape
    Cout = weight.shape[1]
    hw = H * W
    L = 8 * hw
    cfg = _chip_config()
    itemsize = jnp.dtype(x.dtype).itemsize
    n_cg = Cout // co_t

    # Input: FREE reshape of NCDHW -> (N, Cin, D*H*W).  No activation transpose at all.
    x_r = x.reshape(N, Cin, D * hw)
    # Weights (tiny): (Cin, Cout, 2,2,2) -> (Cout//co_t, 8*co_t, Cin), rows tap-major within a
    # co group, so the kernel runs ONE matmul per block and slices tap rows statically.
    w_r = jnp.transpose(weight, (2, 3, 4, 1, 0)).reshape(8, n_cg, co_t, Cin)
    w_r = jnp.transpose(w_r, (1, 0, 2, 3)).reshape(n_cg, 8 * co_t, Cin)
    b_r = bias.reshape(Cout, 1)

    live = _fused_live_bytes(Cin, hw, co_t, d_tile, itemsize)
    vmem_limit = int(min(cfg["limit_cap"], max(32 << 20, 2 * live)))
    cost = pl.CostEstimate(
        flops=2 * N * D * hw * Cin * Cout * 8,
        transcendentals=0,
        bytes_accessed=int((x_r.size + N * Cout * D * L) * itemsize
                           + w_r.size * jnp.dtype(weight.dtype).itemsize))

    y_flat = pl.pallas_call(
        functools.partial(_fused_kernel, H=H, W=W, d_tile=d_tile),
        out_shape=jax.ShapeDtypeStruct((N, Cout, D * L), x.dtype),
        grid_spec=pltpu.PrefetchScalarGridSpec(
            num_scalar_prefetch=0,
            grid=(N, D // d_tile, n_cg),              # co innermost: input block stays resident
            in_specs=[
                pl.BlockSpec((1, Cin, d_tile * hw), lambda n, d, c: (n, 0, d)),
                pl.BlockSpec((1, 8 * co_t, Cin), lambda n, d, c: (c, 0, 0)),
                pl.BlockSpec((co_t, 1), lambda n, d, c: (c, 0)),
            ],
            out_specs=pl.BlockSpec((1, co_t, d_tile * L), lambda n, d, c: (n, c, d)),
        ),
        compiler_params=pltpu.CompilerParams(
            dimension_semantics=("parallel", "parallel", "parallel"),
            vmem_limit_bytes=vmem_limit),
        cost_estimate=cost,
    )(x_r, w_r, b_r)

    # (N, Cout, D*8HW) is bit-identical in memory to (N, Cout, 2D, 2H, 2W): free reshape.
    return y_flat.reshape(N, Cout, 2 * D, 2 * H, 2 * W)


# -----------------------------------------------------------------------------
# Fallback path: big-tile matmul kernel + XLA layout epilogue
# -----------------------------------------------------------------------------
def _matmul_kernel(x_ref, w_ref, b_ref, o_ref):
    # x_ref: (TM, Cin), w_ref: (Cin, TN), b_ref: (1, TN), o_ref: (TM, TN)
    acc = jnp.dot(x_ref[...], w_ref[...], preferred_element_type=jnp.float32)
    o_ref[...] = (acc + b_ref[...]).astype(o_ref.dtype)


def _deconv_matmul(x, weight, bias, tile_m=1024):
    N, Cin, D, H, W = x.shape
    Cout = weight.shape[1]
    cfg = _chip_config()
    itemsize = jnp.dtype(x.dtype).itemsize
    align = 16 if itemsize < 4 else 8
    work = cfg["work_budget"]

    x_mat = jnp.transpose(x, (0, 2, 3, 4, 1)).reshape(N * D * H * W, Cin)
    w_mat = weight.reshape(Cin, Cout * 8)             # columns: co-major, tap-minor
    b_mat = jnp.repeat(bias, 8).reshape(1, Cout * 8)
    M, Nout = N * D * H * W, Cout * 8

    # Lane-dense output columns; tile the weight along N if it would hog VMEM.
    Nout_p = max(128, _round_up(Nout, 128))
    tile_n = Nout_p
    while tile_n > 128 and 2 * Cin * tile_n * itemsize > work // 4:
        tile_n = max(128, _round_up(tile_n // 2, 128))
    Nout_p = _round_up(Nout_p, tile_n)
    if Nout_p != Nout:
        w_mat = jnp.pad(w_mat, ((0, 0), (0, Nout_p - Nout)))
        b_mat = jnp.pad(b_mat, ((0, 0), (0, Nout_p - Nout)))

    def live(tm):
        return (2 * tm * Cin * itemsize               # input block (double-buffered)
                + 2 * Cin * tile_n * itemsize         # weight block (2 buffers)
                + 2 * 8 * tile_n * itemsize           # bias block (sublane-padded)
                + 2 * tm * tile_n * itemsize          # output block (double-buffered)
                + tm * tile_n * 4)                    # f32 accumulator temporary

    tile_m = max(align, (min(tile_m, _round_up(M, align)) // align) * align)
    while tile_m > align and live(tile_m) > work:
        tile_m = max(align, ((tile_m // 2) // align) * align)

    num_m = pl.cdiv(M, tile_m)
    num_n = Nout_p // tile_n
    if cfg["two_tc"] and num_m > 1 and (num_m * num_n) % 2 == 1:
        num_m += 1                                    # keep both v7x TensorCores busy
    Mp = num_m * tile_m
    if Mp != M:
        x_mat = jnp.pad(x_mat, ((0, Mp - M), (0, 0)))

    vmem_limit = int(min(cfg["limit_cap"], max(32 << 20, 2 * live(tile_m))))
    cost = pl.CostEstimate(
        flops=2 * M * Cin * Nout,
        transcendentals=0,
        bytes_accessed=int((M * Cin + Cin * Nout_p + M * Nout_p) * itemsize))

    y_mat = pl.pallas_call(
        _matmul_kernel,
        out_shape=jax.ShapeDtypeStruct((Mp, Nout_p), x.dtype),
        grid_spec=pltpu.PrefetchScalarGridSpec(
            num_scalar_prefetch=0,
            grid=(num_m, num_n),
            in_specs=[
                pl.BlockSpec((tile_m, Cin), lambda i, j: (i, 0)),
                pl.BlockSpec((Cin, tile_n), lambda i, j: (0, j)),
                pl.BlockSpec((1, tile_n), lambda i, j: (0, j)),
            ],
            out_specs=pl.BlockSpec((tile_m, tile_n), lambda i, j: (i, j)),
        ),
        compiler_params=pltpu.CompilerParams(
            dimension_semantics=("parallel", "parallel"),
            vmem_limit_bytes=vmem_limit),
        cost_estimate=cost,
    )(x_mat, w_mat, b_mat)

    y_mat = y_mat[:M, :Nout]
    # Layout-only epilogue (extra HBM pass over the 8x output; the fused path avoids this).
    y = y_mat.reshape(N, D, H, W, Cout, 2, 2, 2)
    y = jnp.transpose(y, (0, 4, 1, 5, 2, 6, 3, 7))
    return y.reshape(N, Cout, 2 * D, 2 * H, 2 * W)


# -----------------------------------------------------------------------------
# Static (jit-safe) path selection
# -----------------------------------------------------------------------------
@functools.lru_cache(maxsize=64)
def _fused_compiles(x_shape, x_dtype, w_dtype, b_dtype, cout, co_t, d_tile):
    """One-time cached AOT probe: does the fused kernel lower & compile for this shape?"""
    try:
        cin = x_shape[1]
        x_s = jax.ShapeDtypeStruct(x_shape, jnp.dtype(x_dtype))
        w_s = jax.ShapeDtypeStruct((cin, cout, 2, 2, 2), jnp.dtype(w_dtype))
        b_s = jax.ShapeDtypeStruct((cout,), jnp.dtype(b_dtype))
        fn = functools.partial(_deconv_fused, co_t=co_t, d_tile=d_tile)
        jax.jit(fn).lower(x_s, w_s, b_s).compile()
        return True
    except Exception:
        return False


def single_deconv3d_block(x, weight, bias, *, mode="auto", tile_m=1024):
    """ConvTranspose3d(kernel=2, stride=2, padding=0) forward.

    x:      (N, Cin, D, H, W)      PyTorch NCDHW layout
    weight: (Cin, Cout, 2, 2, 2)   PyTorch ConvTranspose3d weight layout
    bias:   (Cout,)
    returns (N, Cout, 2D, 2H, 2W)

    mode:
      "auto"   : fused NCDHW-direct kernel when the shape tiles cleanly and a cached AOT
                 compile probe succeeds; otherwise the padded-matmul kernel (static, jit-safe).
      "fused"  : force the fused kernel (raises if the shape is not eligible).
      "matmul" : force the matmul + XLA-relayout kernel.
    """
    if mode not in ("auto", "fused", "matmul"):
        raise ValueError(f"unknown mode: {mode!r}")
    Cout = int(weight.shape[1])
    if mode != "matmul":
        cfg = _chip_config()
        tiles = _fused_tiles(tuple(map(int, x.shape)), Cout,
                             jnp.dtype(x.dtype).itemsize, cfg["work_budget"], cfg["two_tc"])
        if tiles is not None:
            co_t, d_tile = tiles
            if mode == "fused":
                return _deconv_fused(x, weight, bias, co_t=co_t, d_tile=d_tile)
            if _fused_compiles(tuple(map(int, x.shape)), str(jnp.dtype(x.dtype)),
                               str(jnp.dtype(weight.dtype)), str(jnp.dtype(bias.dtype)),
                               Cout, co_t, d_tile):
                return _deconv_fused(x, weight, bias, co_t=co_t, d_tile=d_tile)
        elif mode == "fused":
            raise ValueError("shape not eligible for the fused path; use mode='auto'/'matmul'")
    return _deconv_matmul(x, weight, bias, tile_m=tile_m)


def _reference(x, weight, bias):
    # Pure-JAX reference (scatter formulation of the stride-2/kernel-2 deconv).
    N, Cin, D, H, W = x.shape
    Cout = weight.shape[1]
    y = jnp.einsum("ncdhw,coxyz->ndhwoxyz", x, weight) + bias.reshape(1, 1, 1, 1, Cout, 1, 1, 1)
    y = jnp.transpose(y, (0, 4, 1, 5, 2, 6, 3, 7)).reshape(N, Cout, 2 * D, 2 * H, 2 * W)
    return y


if __name__ == "__main__":
    key = jax.random.PRNGKey(0)
    k1, k2, k3 = jax.random.split(key, 3)

    # Small shapes consistent with the module: batch=2, in_planes=4, out_planes=16, spatial=8.
    N, Cin, Cout, D, H, W = 2, 4, 16, 8, 8, 8

    x = jax.random.normal(k1, (N, Cin, D, H, W), dtype=jnp.float32)
    weight = jax.random.normal(k2, (Cin, Cout, 2, 2, 2), dtype=jnp.float32) * 0.1
    bias = jax.random.normal(k3, (Cout,), dtype=jnp.float32) * 0.1

    y_ref = _reference(x, weight, bias)

    # Default ("auto") path: fused NCDHW-direct kernel (with static fallback if it can't lower).
    y = jax.block_until_ready(single_deconv3d_block(x, weight, bias))
    assert y.shape == (N, Cout, 2 * D, 2 * H, 2 * W)
    assert jnp.allclose(y, y_ref, atol=1e-4, rtol=1e-4)

    # Fallback path is also exercised and checked.
    y_mm = jax.block_until_ready(single_deconv3d_block(x, weight, bias, mode="matmul"))
    assert jnp.allclose(y_mm, y_ref, atol=1e-4, rtol=1e-4)

    # The "auto" decision is fully static, so the wrapper is jit-safe.
    y_jit = jax.block_until_ready(jax.jit(single_deconv3d_block)(x, weight, bias))
    assert jnp.allclose(y_jit, y_ref, atol=1e-4, rtol=1e-4)

    print("KERNEL_OK")
</pallas_src>

<mosaic_0001>
module attributes {stable_mosaic.version = 11 : i64} {
  func.func @_matmul_kernel(%arg0: i32, %arg1: i32, %arg2: memref<1024x4xf32, #tpu.memory_space<vmem>>, %arg3: memref<4x128xf32, #tpu.memory_space<vmem>>, %arg4: memref<1x128xf32, #tpu.memory_space<vmem>>, %arg5: memref<1024x128xf32, #tpu.memory_space<vmem>>) attributes {dimension_semantics = [#tpu.dimension_semantics<parallel>, #tpu.dimension_semantics<parallel>], iteration_bounds = array<i64: 1, 1>, scalar_prefetch = 0 : i64, scratch_operands = 0 : i64, tpu.core_type = #tpu.core_type<tc>, window_params = [{transform_indices = @transform_0, window_bounds = array<i64: 1024, 4>}, {transform_indices = @transform_1, window_bounds = array<i64: 4, 128>}, {transform_indices = @transform_2, window_bounds = array<i64: 1, 128>}, {transform_indices = @transform_3, window_bounds = array<i64: 1024, 128>}]} {
    %c0 = arith.constant 0 : index
    %c0_0 = arith.constant 0 : index
    %0 = vector.load %arg2[%c0, %c0_0] : memref<1024x4xf32, #tpu.memory_space<vmem>>, vector<1024x4xf32>
    %c0_1 = arith.constant 0 : index
    %c0_2 = arith.constant 0 : index
    %1 = vector.load %arg3[%c0_1, %c0_2] : memref<4x128xf32, #tpu.memory_space<vmem>>, vector<4x128xf32>
    %cst = arith.constant dense<0.000000e+00> : vector<1024x128xf32>
    %2 = tpu.matmul %0, %1, %cst {dimension_numbers = #tpu.dot_dimension_numbers<[1], [0], [0], [1], [0, 0, 1, 1], [], []>} : vector<1024x4xf32>, vector<4x128xf32>, vector<1024x128xf32> -> vector<1024x128xf32>
    %c0_3 = arith.constant 0 : index
    %c0_4 = arith.constant 0 : index
    %3 = vector.load %arg4[%c0_3, %c0_4] : memref<1x128xf32, #tpu.memory_space<vmem>>, vector<1x128xf32>
    %4 = vector.broadcast %3 : vector<1x128xf32> to vector<1024x128xf32>
    %5 = arith.addf %2, %4 : vector<1024x128xf32>
    %c0_5 = arith.constant 0 : index
    %c0_6 = arith.constant 0 : index
    %6 = vector.load %arg5[%c0_5, %c0_6] : memref<1024x128xf32, #tpu.memory_space<vmem>>, vector<1024x128xf32>
    tpu.vector_store %arg5[%c0_5, %c0_6], %5 {strides = array<i32>} : memref<1024x128xf32, #tpu.memory_space<vmem>>, vector<1024x128xf32>,
    return
  }
  func.func @transform_0(%arg0: i32, %arg1: i32) -> (i32, i32) {
    %c0_i32 = arith.constant 0 : i32
    %c0_i32_0 = arith.constant 0 : i32
    return %arg0, %c0_i32 : i32, i32
  }
  func.func @transform_1(%arg0: i32, %arg1: i32) -> (i32, i32) {
    %c0_i32 = arith.constant 0 : i32
    %c0_i32_0 = arith.constant 0 : i32
    return %c0_i32, %arg1 : i32, i32
  }
  func.func @transform_2(%arg0: i32, %arg1: i32) -> (i32, i32) {
    %c0_i32 = arith.constant 0 : i32
    %c0_i32_0 = arith.constant 0 : i32
    return %c0_i32, %arg1 : i32, i32
  }
  func.func @transform_3(%arg0: i32, %arg1: i32) -> (i32, i32) {
    %c0_i32 = arith.constant 0 : i32
    return %arg0, %arg1 : i32, i32
  }
}

</mosaic_0001>

<llo_original>
// kernel: tpu_custom_call.1
$region0: #{tpu_custom_call.1}
  #allocation0 [shape = 'u32[]', space=smem, size = 0x4, offset = 0x4, fixed_abs, tag = 'smem constant byte address 0x4 - core index']
  #allocation1 [shape = 'u32[144,128]{1,0:T(1,128)}', space=vmem, size = 0x12000, scoped, tag = 'internal scratch']
  %s0 = inlined_call_operand.vmem [shape: f32[1024,4], index: 0, kind: input, shape index: {}]
  %s1 = inlined_call_operand.vmem [shape: f32[4,128], index: 1, kind: input, shape index: {}]
  %s2 = inlined_call_operand.vmem [shape: f32[1,128], index: 2, kind: input, shape index: {}]
  %s3 = inlined_call_operand.hbm [shape: f32[1024,128], index: 3, kind: output, shape index: {}]
  %s4 = sld [smem:[#allocation0]]
  $region22: #{tpu_custom_call.1} parent=0
    _
  %s6 = ssub.s32 1, %s4
  %s7 = scalar_select 0, %s6, %s4
  $region1: #{tpu_custom_call.1} parent=0
    #allocation2 [shape = 'u8[524288]{0}', space=vmem, size = 0x80000, scoped, tag = 'output window, operand 0, single buffered']
    #allocation3 [shape = 's32[1]{0}', space=sflag, size = 0x4, scoped, tag = 'scoped memory for tpu_custom_call.1']
    %8 = vsyncpa [#allocation3], 0
    // Predicated region
    $region2: #{tpu_custom_call.1} parent=1 // pred_check
      _
    $region3: #{tpu_custom_call.1} parent=1 // pred_check_branch
      %10 = sbr.rel (0) target = $region5
    $region4: #{tpu_custom_call.1} parent=1 // pred_region
      _
    $region5: #{tpu_custom_call.1} parent=1 // pred_fallthru
      _
    // Predicated region
    $region6: #{tpu_custom_call.1} parent=1 // pred_check
      _
    $region7: #{tpu_custom_call.1} parent=1 // pred_check_branch
      %12 = sbr.rel (0) target = $region9
    $region8: #{tpu_custom_call.1} parent=1 // pred_region
      _
    $region9: #{tpu_custom_call.1} parent=1 // pred_fallthru
      _
    // Predicated region
    $region10: #{tpu_custom_call.1} parent=1 // pred_check
      _
    $region11: #{tpu_custom_call.1} parent=1 // pred_check_branch
      %14 = sbr.rel (0) target = $region13
    $region12: #{tpu_custom_call.1} parent=1 // pred_region
      _
    $region13: #{tpu_custom_call.1} parent=1 // pred_fallthru
      _
    %v15 = vld [vmem:[%s0] sm:$0xff]
    %v16 = vld [vmem:[%s0 + $0x8] sm:$0xff]
    %v17 = vld [vmem:[%s0 + $0x10] sm:$0xff]
    %v18 = vld [vmem:[%s0 + $0x18] sm:$0xff]
    %v19 = vld [vmem:[%s0 + $0x20] sm:$0xff]
    %v20 = vld [vmem:[%s0 + $0x28] sm:$0xff]
    %v21 = vld [vmem:[%s0 + $0x30] sm:$0xff]
    %v22 = vld [vmem:[%s0 + $0x38] sm:$0xff]
    %v23 = vld [vmem:[%s0 + $0x40] sm:$0xff]
    %v24 = vld [vmem:[%s0 + $0x48] sm:$0xff]
    %v25 = vld [vmem:[%s0 + $0x50] sm:$0xff]
    %v26 = vld [vmem:[%s0 + $0x58] sm:$0xff]
    %v27 = vld [vmem:[%s0 + $0x60] sm:$0xff]
    %v28 = vld [vmem:[%s0 + $0x68] sm:$0xff]
    %v29 = vld [vmem:[%s0 + $0x70] sm:$0xff]
    %v30 = vld [vmem:[%s0 + $0x78] sm:$0xff]
    %v31 = vld [vmem:[%s0 + $0x80] sm:$0xff]
    %v32 = vld [vmem:[%s0 + $0x88] sm:$0xff]
    %v33 = vld [vmem:[%s0 + $0x90] sm:$0xff]
    %v34 = vld [vmem:[%s0 + $0x98] sm:$0xff]
    %v35 = vld [vmem:[%s0 + $0xa0] sm:$0xff]
    %v36 = vld [vmem:[%s0 + $0xa8] sm:$0xff]
    %v37 = vld [vmem:[%s0 + $0xb0] sm:$0xff]
    %v38 = vld [vmem:[%s0 + $0xb8] sm:$0xff]
    %v39 = vld [vmem:[%s0 + $0xc0] sm:$0xff]
    %v40 = vld [vmem:[%s0 + $0xc8] sm:$0xff]
    %v41 = vld [vmem:[%s0 + $0xd0] sm:$0xff]
    %v42 = vld [vmem:[%s0 + $0xd8] sm:$0xff]
    %v43 = vld [vmem:[%s0 + $0xe0] sm:$0xff]
    %v44 = vld [vmem:[%s0 + $0xe8] sm:$0xff]
    %v45 = vld [vmem:[%s0 + $0xf0] sm:$0xff]
    %v46 = vld [vmem:[%s0 + $0xf8] sm:$0xff]
    %v47 = vld [vmem:[%s0 + $0x100] sm:$0xff]
    %v48 = vld [vmem:[%s0 + $0x108] sm:$0xff]
    %v49 = vld [vmem:[%s0 + $0x110] sm:$0xff]
    %v50 = vld [vmem:[%s0 + $0x118] sm:$0xff]
    %v51 = vld [vmem:[%s0 + $0x120] sm:$0xff]
    %v52 = vld [vmem:[%s0 + $0x128] sm:$0xff]
    %v53 = vld [vmem:[%s0 + $0x130] sm:$0xff]
    %v54 = vld [vmem:[%s0 + $0x138] sm:$0xff]
    %v55 = vld [vmem:[%s0 + $0x140] sm:$0xff]
    %v56 = vld [vmem:[%s0 + $0x148] sm:$0xff]
    %v57 = vld [vmem:[%s0 + $0x150] sm:$0xff]
    %v58 = vld [vmem:[%s0 + $0x158] sm:$0xff]
    %v59 = vld [vmem:[%s0 + $0x160] sm:$0xff]
    %v60 = vld [vmem:[%s0 + $0x168] sm:$0xff]
    %v61 = vld [vmem:[%s0 + $0x170] sm:$0xff]
    %v62 = vld [vmem:[%s0 + $0x178] sm:$0xff]
    %v63 = vld [vmem:[%s0 + $0x180] sm:$0xff]
    %v64 = vld [vmem:[%s0 + $0x188] sm:$0xff]
    %v65 = vld [vmem:[%s0 + $0x190] sm:$0xff]
    %v66 = vld [vmem:[%s0 + $0x198] sm:$0xff]
    %v67 = vld [vmem:[%s0 + $0x1a0] sm:$0xff]
    %v68 = vld [vmem:[%s0 + $0x1a8] sm:$0xff]
    %v69 = vld [vmem:[%s0 + $0x1b0] sm:$0xff]
    %v70 = vld [vmem:[%s0 + $0x1b8] sm:$0xff]
    %v71 = vld [vmem:[%s0 + $0x1c0] sm:$0xff]
    %v72 = vld [vmem:[%s0 + $0x1c8] sm:$0xff]
    %v73 = vld [vmem:[%s0 + $0x1d0] sm:$0xff]
    %v74 = vld [vmem:[%s0 + $0x1d8] sm:$0xff]
    %v75 = vld [vmem:[%s0 + $0x1e0] sm:$0xff]
    %v76 = vld [vmem:[%s0 + $0x1e8] sm:$0xff]
    %v77 = vld [vmem:[%s0 + $0x1f0] sm:$0xff]
    %v78 = vld [vmem:[%s0 + $0x1f8] sm:$0xff]
    %v79 = vld [vmem:[%s0 + $0x200] sm:$0xff]
    %v80 = vld [vmem:[%s0 + $0x208] sm:$0xff]
    %v81 = vld [vmem:[%s0 + $0x210] sm:$0xff]
    %v82 = vld [vmem:[%s0 + $0x218] sm:$0xff]
    %v83 = vld [vmem:[%s0 + $0x220] sm:$0xff]
    %v84 = vld [vmem:[%s0 + $0x228] sm:$0xff]
    %v85 = vld [vmem:[%s0 + $0x230] sm:$0xff]
    %v86 = vld [vmem:[%s0 + $0x238] sm:$0xff]
    %v87 = vld [vmem:[%s0 + $0x240] sm:$0xff]
    %v88 = vld [vmem:[%s0 + $0x248] sm:$0xff]
    %v89 = vld [vmem:[%s0 + $0x250] sm:$0xff]
    %v90 = vld [vmem:[%s0 + $0x258] sm:$0xff]
    %v91 = vld [vmem:[%s0 + $0x260] sm:$0xff]
    %v92 = vld [vmem:[%s0 + $0x268] sm:$0xff]
    %v93 = vld [vmem:[%s0 + $0x270] sm:$0xff]
    %v94 = vld [vmem:[%s0 + $0x278] sm:$0xff]
    %v95 = vld [vmem:[%s0 + $0x280] sm:$0xff]
    %v96 = vld [vmem:[%s0 + $0x288] sm:$0xff]
    %v97 = vld [vmem:[%s0 + $0x290] sm:$0xff]
    %v98 = vld [vmem:[%s0 + $0x298] sm:$0xff]
    %v99 = vld [vmem:[%s0 + $0x2a0] sm:$0xff]
    %v100 = vld [vmem:[%s0 + $0x2a8] sm:$0xff]
    %v101 = vld [vmem:[%s0 + $0x2b0] sm:$0xff]
    %v102 = vld [vmem:[%s0 + $0x2b8] sm:$0xff]
    %v103 = vld [vmem:[%s0 + $0x2c0] sm:$0xff]
    %v104 = vld [vmem:[%s0 + $0x2c8] sm:$0xff]
    %v105 = vld [vmem:[%s0 + $0x2d0] sm:$0xff]
    %v106 = vld [vmem:[%s0 + $0x2d8] sm:$0xff]
    %v107 = vld [vmem:[%s0 + $0x2e0] sm:$0xff]
    %v108 = vld [vmem:[%s0 + $0x2e8] sm:$0xff]
    %v109 = vld [vmem:[%s0 + $0x2f0] sm:$0xff]
    %v110 = vld [vmem:[%s0 + $0x2f8] sm:$0xff]
    %v111 = vld [vmem:[%s0 + $0x300] sm:$0xff]
    %v112 = vld [vmem:[%s0 + $0x308] sm:$0xff]
    %v113 = vld [vmem:[%s0 + $0x310] sm:$0xff]
    %v114 = vld [vmem:[%s0 + $0x318] sm:$0xff]
    %v115 = vld [vmem:[%s0 + $0x320] sm:$0xff]
    %v116 = vld [vmem:[%s0 + $0x328] sm:$0xff]
    %v117 = vld [vmem:[%s0 + $0x330] sm:$0xff]
    %v118 = vld [vmem:[%s0 + $0x338] sm:$0xff]
    %v119 = vld [vmem:[%s0 + $0x340] sm:$0xff]
    %v120 = vld [vmem:[%s0 + $0x348] sm:$0xff]
    %v121 = vld [vmem:[%s0 + $0x350] sm:$0xff]
    %v122 = vld [vmem:[%s0 + $0x358] sm:$0xff]
    %v123 = vld [vmem:[%s0 + $0x360] sm:$0xff]
    %v124 = vld [vmem:[%s0 + $0x368] sm:$0xff]
    %v125 = vld [vmem:[%s0 + $0x370] sm:$0xff]
    %v126 = vld [vmem:[%s0 + $0x378] sm:$0xff]
    %v127 = vld [vmem:[%s0 + $0x380] sm:$0xff]
    %v128 = vld [vmem:[%s0 + $0x388] sm:$0xff]
    %v129 = vld [vmem:[%s0 + $0x390] sm:$0xff]
    %v130 = vld [vmem:[%s0 + $0x398] sm:$0xff]
    %v131 = vld [vmem:[%s0 + $0x3a0] sm:$0xff]
    %v132 = vld [vmem:[%s0 + $0x3a8] sm:$0xff]
    %v133 = vld [vmem:[%s0 + $0x3b0] sm:$0xff]
    %v134 = vld [vmem:[%s0 + $0x3b8] sm:$0xff]
    %v135 = vld [vmem:[%s0 + $0x3c0] sm:$0xff]
    %v136 = vld [vmem:[%s0 + $0x3c8] sm:$0xff]
    %v137 = vld [vmem:[%s0 + $0x3d0] sm:$0xff]
    %v138 = vld [vmem:[%s0 + $0x3d8] sm:$0xff]
    %v139 = vld [vmem:[%s0 + $0x3e0] sm:$0xff]
    %v140 = vld [vmem:[%s0 + $0x3e8] sm:$0xff]
    %v141 = vld [vmem:[%s0 + $0x3f0] sm:$0xff]
    %v142 = vld [vmem:[%s0 + $0x3f8] sm:$0xff]
    %v143 = vld [vmem:[%s1] sm:$0xf]
    %v144 = vld [vmem:[%s2] sm:$0x1]
    %v146 = vlaneseq
    %v147 = vshrl.u32 %v146, 7
    %v148 = vsub.s32 0, %v147
    %v149 = vrot.slane %v144, %v148
    %vm151 = vcmask 31744
    %v153 = vsel %vm151, %v15, 0
    %v156 = vsel %vm151, %v16, 0
    %v159 = vsel %vm151, %v17, 0
    %v162 = vsel %vm151, %v18, 0
    %v165 = vsel %vm151, %v19, 0
    %v168 = vsel %vm151, %v20, 0
    %v171 = vsel %vm151, %v21, 0
    %v174 = vsel %vm151, %v22, 0
    %v177 = vsel %vm151, %v23, 0
    %v180 = vsel %vm151, %v24, 0
    %v183 = vsel %vm151, %v25, 0
    %v186 = vsel %vm151, %v26, 0
    %v189 = vsel %vm151, %v27, 0
    %v192 = vsel %vm151, %v28, 0
    %v195 = vsel %vm151, %v29, 0
    %v198 = vsel %vm151, %v30, 0
    %v201 = vsel %vm151, %v31, 0
    %v204 = vsel %vm151, %v32, 0
    %v207 = vsel %vm151, %v33, 0
    %v210 = vsel %vm151, %v34, 0
    %v213 = vsel %vm151, %v35, 0
    %v216 = vsel %vm151, %v36, 0
    %v219 = vsel %vm151, %v37, 0
    %v222 = vsel %vm151, %v38, 0
    %v225 = vsel %vm151, %v39, 0
    %v228 = vsel %vm151, %v40, 0
    %v231 = vsel %vm151, %v41, 0
    %v234 = vsel %vm151, %v42, 0
    %v237 = vsel %vm151, %v43, 0
    %v240 = vsel %vm151, %v44, 0
    %v243 = vsel %vm151, %v45, 0
    %v246 = vsel %vm151, %v46, 0
    %v249 = vsel %vm151, %v47, 0
    %v252 = vsel %vm151, %v48, 0
    %v255 = vsel %vm151, %v49, 0
    %v258 = vsel %vm151, %v50, 0
    %v261 = vsel %vm151, %v51, 0
    %v264 = vsel %vm151, %v52, 0
    %v267 = vsel %vm151, %v53, 0
    %v270 = vsel %vm151, %v54, 0
    %v273 = vsel %vm151, %v55, 0
    %v276 = vsel %vm151, %v56, 0
    %v279 = vsel %vm151, %v57, 0
    %v282 = vsel %vm151, %v58, 0
    %v285 = vsel %vm151, %v59, 0
    %v288 = vsel %vm151, %v60, 0
    %v291 = vsel %vm151, %v61, 0
    %v294 = vsel %vm151, %v62, 0
    %v297 = vsel %vm151, %v63, 0
    %v300 = vsel %vm151, %v64, 0
    %v303 = vsel %vm151, %v65, 0
    %v306 = vsel %vm151, %v66, 0
    %v309 = vsel %vm151, %v67, 0
    %v312 = vsel %vm151, %v68, 0
    %v315 = vsel %vm151, %v69, 0
    %v318 = vsel %vm151, %v70, 0
    %v321 = vsel %vm151, %v71, 0
    %v324 = vsel %vm151, %v72, 0
    %v327 = vsel %vm151, %v73, 0
    %v330 = vsel %vm151, %v74, 0
    %v333 = vsel %vm151, %v75, 0
    %v336 = vsel %vm151, %v76, 0
    %v339 = vsel %vm151, %v77, 0
    %v342 = vsel %vm151, %v78, 0
    %v345 = vsel %vm151, %v79, 0
    %v348 = vsel %vm151, %v80, 0
    %v351 = vsel %vm151, %v81, 0
    %v354 = vsel %vm151, %v82, 0
    %v357 = vsel %vm151, %v83, 0
    %v360 = vsel %vm151, %v84, 0
    %v363 = vsel %vm151, %v85, 0
    %v366 = vsel %vm151, %v86, 0
    %v369 = vsel %vm151, %v87, 0
    %v372 = vsel %vm151, %v88, 0
    %v375 = vsel %vm151, %v89, 0
    %v378 = vsel %vm151, %v90, 0
    %v381 = vsel %vm151, %v91, 0
    %v384 = vsel %vm151, %v92, 0
    %v387 = vsel %vm151, %v93, 0
    %v390 = vsel %vm151, %v94, 0
    %v393 = vsel %vm151, %v95, 0
    %v396 = vsel %vm151, %v96, 0
    %v399 = vsel %vm151, %v97, 0
    %v402 = vsel %vm151, %v98, 0
    %v405 = vsel %vm151, %v99, 0
    %v408 = vsel %vm151, %v100, 0
    %v411 = vsel %vm151, %v101, 0
    %v414 = vsel %vm151, %v102, 0
    %v417 = vsel %vm151, %v103, 0
    %v420 = vsel %vm151, %v104, 0
    %v423 = vsel %vm151, %v105, 0
    %v426 = vsel %vm151, %v106, 0
    %v429 = vsel %vm151, %v107, 0
    %v432 = vsel %vm151, %v108, 0
    %v435 = vsel %vm151, %v109, 0
    %v438 = vsel %vm151, %v110, 0
    %v441 = vsel %vm151, %v111, 0
    %v444 = vsel %vm151, %v112, 0
    %v447 = vsel %vm151, %v113, 0
    %v450 = vsel %vm151, %v114, 0
    %v453 = vsel %vm151, %v115, 0
    %v456 = vsel %vm151, %v116, 0
    %v459 = vsel %vm151, %v117, 0
    %v462 = vsel %vm151, %v118, 0
    %v465 = vsel %vm151, %v119, 0
    %v468 = vsel %vm151, %v120, 0
    %v471 = vsel %vm151, %v121, 0
    %v474 = vsel %vm151, %v122, 0
    %v477 = vsel %vm151, %v123, 0
    %v480 = vsel %vm151, %v124, 0
    %v483 = vsel %vm151, %v125, 0
    %v486 = vsel %vm151, %v126, 0
    %v489 = vsel %vm151, %v127, 0
    %v492 = vsel %vm151, %v128, 0
    %v495 = vsel %vm151, %v129, 0
    %v498 = vsel %vm151, %v130, 0
    %v501 = vsel %vm151, %v131, 0
    %v504 = vsel %vm151, %v132, 0
    %v507 = vsel %vm151, %v133, 0
    %v510 = vsel %vm151, %v134, 0
    %v513 = vsel %vm151, %v135, 0
    %v516 = vsel %vm151, %v136, 0
    %v519 = vsel %vm151, %v137, 0
    %v522 = vsel %vm151, %v138, 0
    %v525 = vsel %vm151, %v139, 0
    %v528 = vsel %vm151, %v140, 0
    %v531 = vsel %vm151, %v141, 0
    %v534 = vsel %vm151, %v142, 0
    %vm536 = vcmask 1043456
    %v538 = vsel %vm536, %v143, 0
    %540 = vmatprep.subr.mxu0 0.0
    %541 = vmatpush1.msra.mxu0 %v538
    %542 = vmatprep.subr.mxu0 0.0
    %543 = vmatpush1.msra.mxu0 0.0
    %544 = vmatprep.subr.mxu0 0.0
    %545 = vmatpush1.msra.mxu0 0.0
    %546 = vmatprep.subr.mxu0 0.0
    %547 = vmatpush1.msra.mxu0 0.0
    %548 = vmatprep.subr.mxu0 0.0
    %549 = vmatpush1.msra.mxu0 0.0
    %550 = vmatprep.subr.mxu0 0.0
    %551 = vmatpush1.msra.mxu0 0.0
    %552 = vmatprep.subr.mxu0 0.0
    %553 = vmatpush1.msra.mxu0 0.0
    %554 = vmatprep.subr.mxu0 0.0
    %555 = vmatpush1.msra.mxu0 0.0
    %556 = vmatprep.subr.mxu0 0.0
    %557 = vmatpush1.msra.mxu0 0.0
    %558 = vmatprep.subr.mxu0 0.0
    %559 = vmatpush1.msra.mxu0 0.0
    %560 = vmatprep.subr.mxu0 0.0
    %561 = vmatpush1.msra.mxu0 0.0
    %562 = vmatprep.subr.mxu0 0.0
    %563 = vmatpush1.msra.mxu0 0.0
    %564 = vmatprep.subr.mxu0 0.0
    %565 = vmatpush1.msra.mxu0 0.0
    %566 = vmatprep.subr.mxu0 0.0
    %567 = vmatpush1.msra.mxu0 0.0
    %568 = vmatprep.subr.mxu0 0.0
    %569 = vmatpush1.msra.mxu0 0.0
    %570 = vmatprep.subr.mxu0 0.0
    %571 = vmatpush1.msra.mxu0 0.0
    %572 = vmatprep.subr.mxu0 0.0
    %573 = vmatpush1.msra.mxu0 0.0
    %574 = vmatprep.subr.mxu0 0.0
    %575 = vmatpush1.msra.mxu0 0.0
    %576 = vmatprep.subr.mxu0 0.0
    %577 = vmatpush1.msra.mxu0 0.0
    %578 = vmatprep.subr.mxu0 0.0
    %579 = vmatpush1.msra.mxu0 0.0
    %580 = vmatprep.subr.mxu0 0.0
    %581 = vmatpush1.msra.mxu0 0.0
    %582 = vmatprep.subr.mxu0 0.0
    %583 = vmatpush1.msra.mxu0 0.0
    %584 = vmatprep.subr.mxu0 0.0
    %585 = vmatpush1.msra.mxu0 0.0
    %586 = vmatprep.subr.mxu0 0.0
    %587 = vmatpush1.msra.mxu0 0.0
    %588 = vmatprep.subr.mxu0 0.0
    %589 = vmatpush1.msra.mxu0 0.0
    %590 = vmatprep.subr.mxu0 0.0
    %591 = vmatpush1.msra.mxu0 0.0
    %592 = vmatprep.subr.mxu0 0.0
    %593 = vmatpush1.msra.mxu0 0.0
    %594 = vmatprep.subr.mxu0 0.0
    %595 = vmatpush1.msra.mxu0 0.0
    %596 = vmatprep.subr.mxu0 0.0
    %597 = vmatpush1.msra.mxu0 0.0
    %598 = vmatprep.subr.mxu0 0.0
    %599 = vmatpush1.msra.mxu0 0.0
    %600 = vmatprep.subr.mxu0 0.0
    %601 = vmatpush1.msra.mxu0 0.0
    %602 = vmatprep.subr.mxu0 0.0
    %603 = vmatpush1.msra.mxu0 0.0
    %604 = vmatprep.mubr.f32.mxu0 0.0
    %605 = vmatmul.mubr.f32.gmra.mrb[0].mxu0 %v153
    %v606 = vpop.f32.mrb[0].mxu0
    %v607 = vadd.f32 %v149, %v606
    %v608 = vpop.f32.mrb[0].mxu0
    %609 = vmatprep.mubr.f32.mxu0 0.0
    %610 = vmatmul.mubr.f32.gmra.mrb[0].mxu0 %v156
    %v611 = vpop.f32.mrb[0].mxu0
    %v612 = vadd.f32 %v149, %v611
    %v613 = vpop.f32.mrb[0].mxu0
    %614 = vmatprep.mubr.f32.mxu0 0.0
    %615 = vmatmul.mubr.f32.gmra.mrb[0].mxu0 %v159
    %v616 = vpop.f32.mrb[0].mxu0
    %v617 = vadd.f32 %v149, %v616
    %v618 = vpop.f32.mrb[0].mxu0
    %619 = vmatprep.mubr.f32.mxu0 0.0
    %620 = vmatmul.mubr.f32.gmra.mrb[0].mxu0 %v162
    %v621 = vpop.f32.mrb[0].mxu0
    %v622 = vadd.f32 %v149, %v621
    %v623 = vpop.f32.mrb[0].mxu0
    %624 = vmatprep.mubr.f32.mxu0 0.0
    %625 = vmatmul.mubr.f32.gmra.mrb[0].mxu0 %v165
    %v626 = vpop.f32.mrb[0].mxu0
    %v627 = vadd.f32 %v149, %v626
    %v628 = vpop.f32.mrb[0].mxu0
    %629 = vmatprep.mubr.f32.mxu0 0.0
    %630 = vmatmul.mubr.f32.gmra.mrb[0].mxu0 %v168
    %v631 = vpop.f32.mrb[0].mxu0
    %v632 = vadd.f32 %v149, %v631
    %v633 = vpop.f32.mrb[0].mxu0
    %634 = vmatprep.mubr.f32.mxu0 0.0
    %635 = vmatmul.mubr.f32.gmra.mrb[0].mxu0 %v171
    %v636 = vpop.f32.mrb[0].mxu0
    %v637 = vadd.f32 %v149, %v636
    %v638 = vpop.f32.mrb[0].mxu0
    %639 = vmatprep.mubr.f32.mxu0 0.0
    %640 = vmatmul.mubr.f32.gmra.mrb[0].mxu0 %v174
    %v641 = vpop.f32.mrb[0].mxu0
    %v642 = vadd.f32 %v149, %v641
    %v643 = vpop.f32.mrb[0].mxu0
    %644 = vmatprep.mubr.f32.mxu0 0.0
    %645 = vmatmul.mubr.f32.gmra.mrb[0].mxu0 %v177
    %v646 = vpop.f32.mrb[0].mxu0
    %v647 = vadd.f32 %v149, %v646
    %v648 = vpop.f32.mrb[0].mxu0
    %649 = vmatprep.mubr.f32.mxu0 0.0
    %650 = vmatmul.mubr.f32.gmra.mrb[0].mxu0 %v180
    %v651 = vpop.f32.mrb[0].mxu0
    %v652 = vadd.f32 %v149, %v651
    %v653 = vpop.f32.mrb[0].mxu0
    %654 = vmatprep.mubr.f32.mxu0 0.0
    %655 = vmatmul.mubr.f32.gmra.mrb[0].mxu0 %v183
    %v656 = vpop.f32.mrb[0].mxu0
    %v657 = vadd.f32 %v149, %v656
    %v658 = vpop.f32.mrb[0].mxu0
    %659 = vmatprep.mubr.f32.mxu0 0.0
    %660 = vmatmul.mubr.f32.gmra.mrb[0].mxu0 %v186
    %v661 = vpop.f32.mrb[0].mxu0
    %v662 = vadd.f32 %v149, %v661
    %v663 = vpop.f32.mrb[0].mxu0
    %664 = vmatprep.mubr.f32.mxu0 0.0
    %665 = vmatmul.mubr.f32.gmra.mrb[0].mxu0 %v189
    %v666 = vpop.f32.mrb[0].mxu0
    %v667 = vadd.f32 %v149, %v666
    %v668 = vpop.f32.mrb[0].mxu0
    %669 = vmatprep.mubr.f32.mxu0 0.0
    %670 = vmatmul.mubr.f32.gmra.mrb[0].mxu0 %v192
    %v671 = vpop.f32.mrb[0].mxu0
    %v672 = vadd.f32 %v149, %v671
    %v673 = vpop.f32.mrb[0].mxu0
    %674 = vmatprep.mubr.f32.mxu0 0.0
    %675 = vmatmul.mubr.f32.gmra.mrb[0].mxu0 %v195
    %v676 = vpop.f32.mrb[0].mxu0
    %v677 = vadd.f32 %v149, %v676
    %v678 = vpop.f32.mrb[0].mxu0
    %679 = vmatprep.mubr.f32.mxu0 0.0
    %680 = vmatmul.mubr.f32.gmra.mrb[0].mxu0 %v198
    %v681 = vpop.f32.mrb[0].mxu0
    %v682 = vadd.f32 %v149, %v681
    %v683 = vpop.f32.mrb[0].mxu0
    %684 = vmatprep.mubr.f32.mxu0 0.0
    %685 = vmatmul.mubr.f32.gmra.mrb[0].mxu0 %v201
    %v686 = vpop.f32.mrb[0].mxu0
    %v687 = vadd.f32 %v149, %v686
    %v688 = vpop.f32.mrb[0].mxu0
    %689 = vmatprep.mubr.f32.mxu0 0.0
    %690 = vmatmul.mubr.f32.gmra.mrb[0].mxu0 %v204
    %v691 = vpop.f32.mrb[0].mxu0
    %v692 = vadd.f32 %v149, %v691
    %v693 = vpop.f32.mrb[0].mxu0
    %694 = vmatprep.mubr.f32.mxu0 0.0
    %695 = vmatmul.mubr.f32.gmra.mrb[0].mxu0 %v207
    %v696 = vpop.f32.mrb[0].mxu0
    %v697 = vadd.f32 %v149, %v696
    %v698 = vpop.f32.mrb[0].mxu0
    %699 = vmatprep.mubr.f32.mxu0 0.0
    %700 = vmatmul.mubr.f32.gmra.mrb[0].mxu0 %v210
    %v701 = vpop.f32.mrb[0].mxu0
    %v702 = vadd.f32 %v149, %v701
    %v703 = vpop.f32.mrb[0].mxu0
    %704 = vmatprep.mubr.f32.mxu0 0.0
    %705 = vmatmul.mubr.f32.gmra.mrb[0].mxu0 %v213
    %v706 = vpop.f32.mrb[0].mxu0
    %v707 = vadd.f32 %v149, %v706
    %v708 = vpop.f32.mrb[0].mxu0
    %709 = vmatprep.mubr.f32.mxu0 0.0
    %710 = vmatmul.mubr.f32.gmra.mrb[0].mxu0 %v216
    %v711 = vpop.f32.mrb[0].mxu0
    %v712 = vadd.f32 %v149, %v711
    %v713 = vpop.f32.mrb[0].mxu0
    %714 = vmatprep.mubr.f32.mxu0 0.0
    %715 = vmatmul.mubr.f32.gmra.mrb[0].mxu0 %v219
    %v716 = vpop.f32.mrb[0].mxu0
    %v717 = vadd.f32 %v149, %v716
    %v718 = vpop.f32.mrb[0].mxu0
    %719 = vmatprep.mubr.f32.mxu0 0.0
    %720 = vmatmul.mubr.f32.gmra.mrb[0].mxu0 %v222
    %v721 = vpop.f32.mrb[0].mxu0
    %v722 = vadd.f32 %v149, %v721
    %v723 = vpop.f32.mrb[0].mxu0
    %724 = vmatprep.mubr.f32.mxu0 0.0
    %725 = vmatmul.mubr.f32.gmra.mrb[0].mxu0 %v225
    %v726 = vpop.f32.mrb[0].mxu0
    %v727 = vadd.f32 %v149, %v726
    %v728 = vpop.f32.mrb[0].mxu0
    %729 = vmatprep.mubr.f32.mxu0 0.0
    %730 = vmatmul.mubr.f32.gmra.mrb[0].mxu0 %v228
    %v731 = vpop.f32.mrb[0].mxu0
    %v732 = vadd.f32 %v149, %v731
    %v733 = vpop.f32.mrb[0].mxu0
    %734 = vmatprep.mubr.f32.mxu0 0.0
    %735 = vmatmul.mubr.f32.gmra.mrb[0].mxu0 %v231
    %v736 = vpop.f32.mrb[0].mxu0
    %v737 = vadd.f32 %v149, %v736
    %v738 = vpop.f32.mrb[0].mxu0
    %739 = vmatprep.mubr.f32.mxu0 0.0
    %740 = vmatmul.mubr.f32.gmra.mrb[0].mxu0 %v234
    %v741 = vpop.f32.mrb[0].mxu0
    %v742 = vadd.f32 %v149, %v741
    %v743 = vpop.f32.mrb[0].mxu0
    %744 = vmatprep.mubr.f32.mxu0 0.0
    %745 = vmatmul.mubr.f32.gmra.mrb[0].mxu0 %v237
    %v746 = vpop.f32.mrb[0].mxu0
    %v747 = vadd.f32 %v149, %v746
    %v748 = vpop.f32.mrb[0].mxu0
    %749 = vmatprep.mubr.f32.mxu0 0.0
    %750 = vmatmul.mubr.f32.gmra.mrb[0].mxu0 %v240
    %v751 = vpop.f32.mrb[0].mxu0
    %v752 = vadd.f32 %v149, %v751
    %v753 = vpop.f32.mrb[0].mxu0
    %754 = vmatprep.mubr.f32.mxu0 0.0
    %755 = vmatmul.mubr.f32.gmra.mrb[0].mxu0 %v243
    %v756 = vpop.f32.mrb[0].mxu0
    %v757 = vadd.f32 %v149, %v756
    %v758 = vpop.f32.mrb[0].mxu0
    %759 = vmatprep.mubr.f32.mxu0 0.0
    %760 = vmatmul.mubr.f32.gmra.mrb[0].mxu0 %v246
    %v761 = vpop.f32.mrb[0].mxu0
    %v762 = vadd.f32 %v149, %v761
    %v763 = vpop.f32.mrb[0].mxu0
    %764 = vmatprep.mubr.f32.mxu0 0.0
    %765 = vmatmul.mubr.f32.gmra.mrb[0].mxu0 %v249
    %v766 = vpop.f32.mrb[0].mxu0
    %v767 = vadd.f32 %v149, %v766
    %v768 = vpop.f32.mrb[0].mxu0
    %769 = vmatprep.mubr.f32.mxu0 0.0
    %770 = vmatmul.mubr.f32.gmra.mrb[0].mxu0 %v252
    %v771 = vpop.f32.mrb[0].mxu0
    %v772 = vadd.f32 %v149, %v771
    %v773 = vpop.f32.mrb[0].mxu0
    %774 = vmatprep.mubr.f32.mxu0 0.0
    %775 = vmatmul.mubr.f32.gmra.mrb[0].mxu0 %v255
    %v776 = vpop.f32.mrb[0].mxu0
    %v777 = vadd.f32 %v149, %v776
    %v778 = vpop.f32.mrb[0].mxu0
    %779 = vmatprep.mubr.f32.mxu0 0.0
    %780 = vmatmul.mubr.f32.gmra.mrb[0].mxu0 %v258
    %v781 = vpop.f32.mrb[0].mxu0
    %v782 = vadd.f32 %v149, %v781
    %v783 = vpop.f32.mrb[0].mxu0
    %784 = vmatprep.mubr.f32.mxu0 0.0
    %785 = vmatmul.mubr.f32.gmra.mrb[0].mxu0 %v261
    %v786 = vpop.f32.mrb[0].mxu0
    %v787 = vadd.f32 %v149, %v786
    %v788 = vpop.f32.mrb[0].mxu0
    %789 = vmatprep.mubr.f32.mxu0 0.0
    %790 = vmatmul.mubr.f32.gmra.mrb[0].mxu0 %v264
    %v791 = vpop.f32.mrb[0].mxu0
    %v792 = vadd.f32 %v149, %v791
    %v793 = vpop.f32.mrb[0].mxu0
    %794 = vmatprep.mubr.f32.mxu0 0.0
    %795 = vmatmul.mubr.f32.gmra.mrb[0].mxu0 %v267
    %v796 = vpop.f32.mrb[0].mxu0
    %v797 = vadd.f32 %v149, %v796
    %v798 = vpop.f32.mrb[0].mxu0
    %799 = vmatprep.mubr.f32.mxu0 0.0
    %800 = vmatmul.mubr.f32.gmra.mrb[0].mxu0 %v270
    %v801 = vpop.f32.mrb[0].mxu0
    %v802 = vadd.f32 %v149, %v801
    %v803 = vpop.f32.mrb[0].mxu0
    %804 = vmatprep.mubr.f32.mxu0 0.0
    %805 = vmatmul.mubr.f32.gmra.mrb[0].mxu0 %v273
    %v806 = vpop.f32.mrb[0].mxu0
    %v807 = vadd.f32 %v149, %v806
    %v808 = vpop.f32.mrb[0].mxu0
    %809 = vmatprep.mubr.f32.mxu0 0.0
    %810 = vmatmul.mubr.f32.gmra.mrb[0].mxu0 %v276
    %v811 = vpop.f32.mrb[0].mxu0
    %v812 = vadd.f32 %v149, %v811
    %v813 = vpop.f32.mrb[0].mxu0
    %814 = vmatprep.mubr.f32.mxu0 0.0
    %815 = vmatmul.mubr.f32.gmra.mrb[0].mxu0 %v279
    %v816 = vpop.f32.mrb[0].mxu0
    %v817 = vadd.f32 %v149, %v816
    %v818 = vpop.f32.mrb[0].mxu0
    %819 = vmatprep.mubr.f32.mxu0 0.0
    %820 = vmatmul.mubr.f32.gmra.mrb[0].mxu0 %v282
    %v821 = vpop.f32.mrb[0].mxu0
    %v822 = vadd.f32 %v149, %v821
    %v823 = vpop.f32.mrb[0].mxu0
    %824 = vmatprep.mubr.f32.mxu0 0.0
    %825 = vmatmul.mubr.f32.gmra.mrb[0].mxu0 %v285
    %v826 = vpop.f32.mrb[0].mxu0
    %v827 = vadd.f32 %v149, %v826
    %v828 = vpop.f32.mrb[0].mxu0
    %829 = vmatprep.mubr.f32.mxu0 0.0
    %830 = vmatmul.mubr.f32.gmra.mrb[0].mxu0 %v288
    %v831 = vpop.f32.mrb[0].mxu0
    %v832 = vadd.f32 %v149, %v831
    %v833 = vpop.f32.mrb[0].mxu0
    %834 = vmatprep.mubr.f32.mxu0 0.0
    %835 = vmatmul.mubr.f32.gmra.mrb[0].mxu0 %v291
    %v836 = vpop.f32.mrb[0].mxu0
    %v837 = vadd.f32 %v149, %v836
    %v838 = vpop.f32.mrb[0].mxu0
    %839 = vmatprep.mubr.f32.mxu0 0.0
    %840 = vmatmul.mubr.f32.gmra.mrb[0].mxu0 %v294
    %v841 = vpop.f32.mrb[0].mxu0
    %v842 = vadd.f32 %v149, %v841
    %v843 = vpop.f32.mrb[0].mxu0
    %844 = vmatprep.mubr.f32.mxu0 0.0
    %845 = vmatmul.mubr.f32.gmra.mrb[0].mxu0 %v297
    %v846 = vpop.f32.mrb[0].mxu0
    %v847 = vadd.f32 %v149, %v846
    %v848 = vpop.f32.mrb[0].mxu0
    %849 = vmatprep.mubr.f32.mxu0 0.0
    %850 = vmatmul.mubr.f32.gmra.mrb[0].mxu0 %v300
    %v851 = vpop.f32.mrb[0].mxu0
    %v852 = vadd.f32 %v149, %v851
    %v853 = vpop.f32.mrb[0].mxu0
    %854 = vmatprep.mubr.f32.mxu0 0.0
    %855 = vmatmul.mubr.f32.gmra.mrb[0].mxu0 %v303
    %v856 = vpop.f32.mrb[0].mxu0
    %v857 = vadd.f32 %v149, %v856
    %v858 = vpop.f32.mrb[0].mxu0
    %859 = vmatprep.mubr.f32.mxu0 0.0
    %860 = vmatmul.mubr.f32.gmra.mrb[0].mxu0 %v306
    %v861 = vpop.f32.mrb[0].mxu0
    %v862 = vadd.f32 %v149, %v861
    %v863 = vpop.f32.mrb[0].mxu0
    %864 = vmatprep.mubr.f32.mxu0 0.0
    %865 = vmatmul.mubr.f32.gmra.mrb[0].mxu0 %v309
    %v866 = vpop.f32.mrb[0].mxu0
    %v867 = vadd.f32 %v149, %v866
    %v868 = vpop.f32.mrb[0].mxu0
    %869 = vmatprep.mubr.f32.mxu0 0.0
    %870 = vmatmul.mubr.f32.gmra.mrb[0].mxu0 %v312
    %v871 = vpop.f32.mrb[0].mxu0
    %v872 = vadd.f32 %v149, %v871
    %v873 = vpop.f32.mrb[0].mxu0
    %874 = vmatprep.mubr.f32.mxu0 0.0
    %875 = vmatmul.mubr.f32.gmra.mrb[0].mxu0 %v315
    %v876 = vpop.f32.mrb[0].mxu0
    %v877 = vadd.f32 %v149, %v876
    %v878 = vpop.f32.mrb[0].mxu0
    %879 = vmatprep.mubr.f32.mxu0 0.0
    %880 = vmatmul.mubr.f32.gmra.mrb[0].mxu0 %v318
    %v881 = vpop.f32.mrb[0].mxu0
    %v882 = vadd.f32 %v149, %v881
    %v883 = vpop.f32.mrb[0].mxu0
    %884 = vmatprep.mubr.f32.mxu0 0.0
    %885 = vmatmul.mubr.f32.gmra.mrb[0].mxu0 %v321
    %v886 = vpop.f32.mrb[0].mxu0
    %v887 = vadd.f32 %v149, %v886
    %v888 = vpop.f32.mrb[0].mxu0
    %889 = vmatprep.mubr.f32.mxu0 0.0
    %890 = vmatmul.mubr.f32.gmra.mrb[0].mxu0 %v324
    %v891 = vpop.f32.mrb[0].mxu0
    %v892 = vadd.f32 %v149, %v891
    %v893 = vpop.f32.mrb[0].mxu0
    %894 = vmatprep.mubr.f32.mxu0 0.0
    %895 = vmatmul.mubr.f32.gmra.mrb[0].mxu0 %v327
    %v896 = vpop.f32.mrb[0].mxu0
    %v897 = vadd.f32 %v149, %v896
    %v898 = vpop.f32.mrb[0].mxu0
    %899 = vmatprep.mubr.f32.mxu0 0.0
    %900 = vmatmul.mubr.f32.gmra.mrb[0].mxu0 %v330
    %v901 = vpop.f32.mrb[0].mxu0
    %v902 = vadd.f32 %v149, %v901
    %v903 = vpop.f32.mrb[0].mxu0
    %904 = vmatprep.mubr.f32.mxu0 0.0
    %905 = vmatmul.mubr.f32.gmra.mrb[0].mxu0 %v333
    %v906 = vpop.f32.mrb[0].mxu0
    %v907 = vadd.f32 %v149, %v906
    %v908 = vpop.f32.mrb[0].mxu0
    %909 = vmatprep.mubr.f32.mxu0 0.0
    %910 = vmatmul.mubr.f32.gmra.mrb[0].mxu0 %v336
    %v911 = vpop.f32.mrb[0].mxu0
    %v912 = vadd.f32 %v149, %v911
    %v913 = vpop.f32.mrb[0].mxu0
    %914 = vmatprep.mubr.f32.mxu0 0.0
    %915 = vmatmul.mubr.f32.gmra.mrb[0].mxu0 %v339
    %v916 = vpop.f32.mrb[0].mxu0
    %v917 = vadd.f32 %v149, %v916
    %v918 = vpop.f32.mrb[0].mxu0
    %919 = vmatprep.mubr.f32.mxu0 0.0
    %920 = vmatmul.mubr.f32.gmra.mrb[0].mxu0 %v342
    %v921 = vpop.f32.mrb[0].mxu0
    %v922 = vadd.f32 %v149, %v921
    %v923 = vpop.f32.mrb[0].mxu0
    %924 = vmatprep.mubr.f32.mxu0 0.0
    %925 = vmatmul.mubr.f32.gmra.mrb[0].mxu0 %v345
    %v926 = vpop.f32.mrb[0].mxu0
    %v927 = vadd.f32 %v149, %v926
    %v928 = vpop.f32.mrb[0].mxu0
    %929 = vmatprep.mubr.f32.mxu0 0.0
    %930 = vmatmul.mubr.f32.gmra.mrb[0].mxu0 %v348
    %v931 = vpop.f32.mrb[0].mxu0
    %v932 = vadd.f32 %v149, %v931
    %v933 = vpop.f32.mrb[0].mxu0
    %934 = vmatprep.mubr.f32.mxu0 0.0
    %935 = vmatmul.mubr.f32.gmra.mrb[0].mxu0 %v351
    %v936 = vpop.f32.mrb[0].mxu0
    %v937 = vadd.f32 %v149, %v936
    %v938 = vpop.f32.mrb[0].mxu0
    %939 = vmatprep.mubr.f32.mxu0 0.0
    %940 = vmatmul.mubr.f32.gmra.mrb[0].mxu0 %v354
    %v941 = vpop.f32.mrb[0].mxu0
    %v942 = vadd.f32 %v149, %v941
    %v943 = vpop.f32.mrb[0].mxu0
    %944 = vmatprep.mubr.f32.mxu0 0.0
    %945 = vmatmul.mubr.f32.gmra.mrb[0].mxu0 %v357
    %v946 = vpop.f32.mrb[0].mxu0
    %v947 = vadd.f32 %v149, %v946
    %v948 = vpop.f32.mrb[0].mxu0
    %949 = vmatprep.mubr.f32.mxu0 0.0
    %950 = vmatmul.mubr.f32.gmra.mrb[0].mxu0 %v360
    %v951 = vpop.f32.mrb[0].mxu0
    %v952 = vadd.f32 %v149, %v951
    %v953 = vpop.f32.mrb[0].mxu0
    %954 = vmatprep.mubr.f32.mxu0 0.0
    %955 = vmatmul.mubr.f32.gmra.mrb[0].mxu0 %v363
    %v956 = vpop.f32.mrb[0].mxu0
    %v957 = vadd.f32 %v149, %v956
    %v958 = vpop.f32.mrb[0].mxu0
    %959 = vmatprep.mubr.f32.mxu0 0.0
    %960 = vmatmul.mubr.f32.gmra.mrb[0].mxu0 %v366
    %v961 = vpop.f32.mrb[0].mxu0
    %v962 = vadd.f32 %v149, %v961
    %v963 = vpop.f32.mrb[0].mxu0
    %964 = vmatprep.mubr.f32.mxu0 0.0
    %965 = vmatmul.mubr.f32.gmra.mrb[0].mxu0 %v369
    %v966 = vpop.f32.mrb[0].mxu0
    %v967 = vadd.f32 %v149, %v966
    %v968 = vpop.f32.mrb[0].mxu0
    %969 = vmatprep.mubr.f32.mxu0 0.0
    %970 = vmatmul.mubr.f32.gmra.mrb[0].mxu0 %v372
    %v971 = vpop.f32.mrb[0].mxu0
    %v972 = vadd.f32 %v149, %v971
    %v973 = vpop.f32.mrb[0].mxu0
    %974 = vmatprep.mubr.f32.mxu0 0.0
    %975 = vmatmul.mubr.f32.gmra.mrb[0].mxu0 %v375
    %v976 = vpop.f32.mrb[0].mxu0
    %v977 = vadd.f32 %v149, %v976
    %v978 = vpop.f32.mrb[0].mxu0
    %979 = vmatprep.mubr.f32.mxu0 0.0
    %980 = vmatmul.mubr.f32.gmra.mrb[0].mxu0 %v378
    %v981 = vpop.f32.mrb[0].mxu0
    %v982 = vadd.f32 %v149, %v981
    %v983 = vpop.f32.mrb[0].mxu0
    %984 = vmatprep.mubr.f32.mxu0 0.0
    %985 = vmatmul.mubr.f32.gmra.mrb[0].mxu0 %v381
    %v986 = vpop.f32.mrb[0].mxu0
    %v987 = vadd.f32 %v149, %v986
    %v988 = vpop.f32.mrb[0].mxu0
    %989 = vmatprep.mubr.f32.mxu0 0.0
    %990 = vmatmul.mubr.f32.gmra.mrb[0].mxu0 %v384
    %v991 = vpop.f32.mrb[0].mxu0
    %v992 = vadd.f32 %v149, %v991
    %v993 = vpop.f32.mrb[0].mxu0
    %994 = vmatprep.mubr.f32.mxu0 0.0
    %995 = vmatmul.mubr.f32.gmra.mrb[0].mxu0 %v387
    %v996 = vpop.f32.mrb[0].mxu0
    %v997 = vadd.f32 %v149, %v996
    %v998 = vpop.f32.mrb[0].mxu0
    %999 = vmatprep.mubr.f32.mxu0 0.0
    %1000 = vmatmul.mubr.f32.gmra.mrb[0].mxu0 %v390
    %v1001 = vpop.f32.mrb[0].mxu0
    %v1002 = vadd.f32 %v149, %v1001
    %v1003 = vpop.f32.mrb[0].mxu0
    %1004 = vmatprep.mubr.f32.mxu0 0.0
    %1005 = vmatmul.mubr.f32.gmra.mrb[0].mxu0 %v393
    %v1006 = vpop.f32.mrb[0].mxu0
    %v1007 = vadd.f32 %v149, %v1006
    %v1008 = vpop.f32.mrb[0].mxu0
    %1009 = vmatprep.mubr.f32.mxu0 0.0
    %1010 = vmatmul.mubr.f32.gmra.mrb[0].mxu0 %v396
    %v1011 = vpop.f32.mrb[0].mxu0
    %v1012 = vadd.f32 %v149, %v1011
    %v1013 = vpop.f32.mrb[0].mxu0
    %1014 = vmatprep.mubr.f32.mxu0 0.0
    %1015 = vmatmul.mubr.f32.gmra.mrb[0].mxu0 %v399
    %v1016 = vpop.f32.mrb[0].mxu0
    %v1017 = vadd.f32 %v149, %v1016
    %v1018 = vpop.f32.mrb[0].mxu0
    %1019 = vmatprep.mubr.f32.mxu0 0.0
    %1020 = vmatmul.mubr.f32.gmra.mrb[0].mxu0 %v402
    %v1021 = vpop.f32.mrb[0].mxu0
    %v1022 = vadd.f32 %v149, %v1021
    %v1023 = vpop.f32.mrb[0].mxu0
    %1024 = vmatprep.mubr.f32.mxu0 0.0
    %1025 = vmatmul.mubr.f32.gmra.mrb[0].mxu0 %v405
    %v1026 = vpop.f32.mrb[0].mxu0
    %v1027 = vadd.f32 %v149, %v1026
    %v1028 = vpop.f32.mrb[0].mxu0
    %1029 = vmatprep.mubr.f32.mxu0 0.0
    %1030 = vmatmul.mubr.f32.gmra.mrb[0].mxu0 %v408
    %v1031 = vpop.f32.mrb[0].mxu0
    %v1032 = vadd.f32 %v149, %v1031
    %v1033 = vpop.f32.mrb[0].mxu0
    %1034 = vmatprep.mubr.f32.mxu0 0.0
    %1035 = vmatmul.mubr.f32.gmra.mrb[0].mxu0 %v411
    %v1036 = vpop.f32.mrb[0].mxu0
    %v1037 = vadd.f32 %v149, %v1036
    %v1038 = vpop.f32.mrb[0].mxu0
    %1039 = vmatprep.mubr.f32.mxu0 0.0
    %1040 = vmatmul.mubr.f32.gmra.mrb[0].mxu0 %v414
    %v1041 = vpop.f32.mrb[0].mxu0
    %v1042 = vadd.f32 %v149, %v1041
    %v1043 = vpop.f32.mrb[0].mxu0
    %1044 = vmatprep.mubr.f32.mxu0 0.0
    %1045 = vmatmul.mubr.f32.gmra.mrb[0].mxu0 %v417
    %v1046 = vpop.f32.mrb[0].mxu0
    %v1047 = vadd.f32 %v149, %v1046
    %v1048 = vpop.f32.mrb[0].mxu0
    %1049 = vmatprep.mubr.f32.mxu0 0.0
    %1050 = vmatmul.mubr.f32.gmra.mrb[0].mxu0 %v420
    %v1051 = vpop.f32.mrb[0].mxu0
    %v1052 = vadd.f32 %v149, %v1051
    %v1053 = vpop.f32.mrb[0].mxu0
    %1054 = vmatprep.mubr.f32.mxu0 0.0
    %1055 = vmatmul.mubr.f32.gmra.mrb[0].mxu0 %v423
    %v1056 = vpop.f32.mrb[0].mxu0
    %v1057 = vadd.f32 %v149, %v1056
    %v1058 = vpop.f32.mrb[0].mxu0
    %1059 = vmatprep.mubr.f32.mxu0 0.0
    %1060 = vmatmul.mubr.f32.gmra.mrb[0].mxu0 %v426
    %v1061 = vpop.f32.mrb[0].mxu0
    %v1062 = vadd.f32 %v149, %v1061
    %v1063 = vpop.f32.mrb[0].mxu0
    %1064 = vmatprep.mubr.f32.mxu0 0.0
    %1065 = vmatmul.mubr.f32.gmra.mrb[0].mxu0 %v429
    %v1066 = vpop.f32.mrb[0].mxu0
    %v1067 = vadd.f32 %v149, %v1066
    %v1068 = vpop.f32.mrb[0].mxu0
    %1069 = vmatprep.mubr.f32.mxu0 0.0
    %1070 = vmatmul.mubr.f32.gmra.mrb[0].mxu0 %v432
    %v1071 = vpop.f32.mrb[0].mxu0
    %v1072 = vadd.f32 %v149, %v1071
    %v1073 = vpop.f32.mrb[0].mxu0
    %1074 = vmatprep.mubr.f32.mxu0 0.0
    %1075 = vmatmul.mubr.f32.gmra.mrb[0].mxu0 %v435
    %v1076 = vpop.f32.mrb[0].mxu0
    %v1077 = vadd.f32 %v149, %v1076
    %v1078 = vpop.f32.mrb[0].mxu0
    %1079 = vmatprep.mubr.f32.mxu0 0.0
    %1080 = vmatmul.mubr.f32.gmra.mrb[0].mxu0 %v438
    %v1081 = vpop.f32.mrb[0].mxu0
    %v1082 = vadd.f32 %v149, %v1081
    %v1083 = vpop.f32.mrb[0].mxu0
    %1084 = vmatprep.mubr.f32.mxu0 0.0
    %1085 = vmatmul.mubr.f32.gmra.mrb[0].mxu0 %v441
    %v1086 = vpop.f32.mrb[0].mxu0
    %v1087 = vadd.f32 %v149, %v1086
    %v1088 = vpop.f32.mrb[0].mxu0
    %1089 = vmatprep.mubr.f32.mxu0 0.0
    %1090 = vmatmul.mubr.f32.gmra.mrb[0].mxu0 %v444
    %v1091 = vpop.f32.mrb[0].mxu0
    %v1092 = vadd.f32 %v149, %v1091
    %v1093 = vpop.f32.mrb[0].mxu0
    %1094 = vmatprep.mubr.f32.mxu0 0.0
    %1095 = vmatmul.mubr.f32.gmra.mrb[0].mxu0 %v447
    %v1096 = vpop.f32.mrb[0].mxu0
    %v1097 = vadd.f32 %v149, %v1096
    %v1098 = vpop.f32.mrb[0].mxu0
    %1099 = vmatprep.mubr.f32.mxu0 0.0
    %1100 = vmatmul.mubr.f32.gmra.mrb[0].mxu0 %v450
    %v1101 = vpop.f32.mrb[0].mxu0
    %v1102 = vadd.f32 %v149, %v1101
    %v1103 = vpop.f32.mrb[0].mxu0
    %1104 = vmatprep.mubr.f32.mxu0 0.0
    %1105 = vmatmul.mubr.f32.gmra.mrb[0].mxu0 %v453
    %v1106 = vpop.f32.mrb[0].mxu0
    %v1107 = vadd.f32 %v149, %v1106
    %v1108 = vpop.f32.mrb[0].mxu0
    %1109 = vmatprep.mubr.f32.mxu0 0.0
    %1110 = vmatmul.mubr.f32.gmra.mrb[0].mxu0 %v456
    %v1111 = vpop.f32.mrb[0].mxu0
    %v1112 = vadd.f32 %v149, %v1111
    %v1113 = vpop.f32.mrb[0].mxu0
    %1114 = vmatprep.mubr.f32.mxu0 0.0
    %1115 = vmatmul.mubr.f32.gmra.mrb[0].mxu0 %v459
    %v1116 = vpop.f32.mrb[0].mxu0
    %v1117 = vadd.f32 %v149, %v1116
    %v1118 = vpop.f32.mrb[0].mxu0
    %1119 = vmatprep.mubr.f32.mxu0 0.0
    %1120 = vmatmul.mubr.f32.gmra.mrb[0].mxu0 %v462
    %v1121 = vpop.f32.mrb[0].mxu0
    %v1122 = vadd.f32 %v149, %v1121
    %v1123 = vpop.f32.mrb[0].mxu0
    %1124 = vmatprep.mubr.f32.mxu0 0.0
    %1125 = vmatmul.mubr.f32.gmra.mrb[0].mxu0 %v465
    %v1126 = vpop.f32.mrb[0].mxu0
    %v1127 = vadd.f32 %v149, %v1126
    %v1128 = vpop.f32.mrb[0].mxu0
    %1129 = vmatprep.mubr.f32.mxu0 0.0
    %1130 = vmatmul.mubr.f32.gmra.mrb[0].mxu0 %v468
    %v1131 = vpop.f32.mrb[0].mxu0
    %v1132 = vadd.f32 %v149, %v1131
    %v1133 = vpop.f32.mrb[0].mxu0
    %1134 = vmatprep.mubr.f32.mxu0 0.0
    %1135 = vmatmul.mubr.f32.gmra.mrb[0].mxu0 %v471
    %v1136 = vpop.f32.mrb[0].mxu0
    %v1137 = vadd.f32 %v149, %v1136
    %v1138 = vpop.f32.mrb[0].mxu0
    %1139 = vmatprep.mubr.f32.mxu0 0.0
    %1140 = vmatmul.mubr.f32.gmra.mrb[0].mxu0 %v474
    %v1141 = vpop.f32.mrb[0].mxu0
    %v1142 = vadd.f32 %v149, %v1141
    %v1143 = vpop.f32.mrb[0].mxu0
    %1144 = vmatprep.mubr.f32.mxu0 0.0
    %1145 = vmatmul.mubr.f32.gmra.mrb[0].mxu0 %v477
    %v1146 = vpop.f32.mrb[0].mxu0
    %v1147 = vadd.f32 %v149, %v1146
    %v1148 = vpop.f32.mrb[0].mxu0
    %1149 = vmatprep.mubr.f32.mxu0 0.0
    %1150 = vmatmul.mubr.f32.gmra.mrb[0].mxu0 %v480
    %v1151 = vpop.f32.mrb[0].mxu0
    %v1152 = vadd.f32 %v149, %v1151
    %v1153 = vpop.f32.mrb[0].mxu0
    %1154 = vmatprep.mubr.f32.mxu0 0.0
    %1155 = vmatmul.mubr.f32.gmra.mrb[0].mxu0 %v483
    %v1156 = vpop.f32.mrb[0].mxu0
    %v1157 = vadd.f32 %v149, %v1156
    %v1158 = vpop.f32.mrb[0].mxu0
    %1159 = vmatprep.mubr.f32.mxu0 0.0
    %1160 = vmatmul.mubr.f32.gmra.mrb[0].mxu0 %v486
    %v1161 = vpop.f32.mrb[0].mxu0
    %v1162 = vadd.f32 %v149, %v1161
    %v1163 = vpop.f32.mrb[0].mxu0
    %1164 = vmatprep.mubr.f32.mxu0 0.0
    %1165 = vmatmul.mubr.f32.gmra.mrb[0].mxu0 %v489
    %v1166 = vpop.f32.mrb[0].mxu0
    %v1167 = vadd.f32 %v149, %v1166
    %v1168 = vpop.f32.mrb[0].mxu0
    %1169 = vmatprep.mubr.f32.mxu0 0.0
    %1170 = vmatmul.mubr.f32.gmra.mrb[0].mxu0 %v492
    %v1171 = vpop.f32.mrb[0].mxu0
    %v1172 = vadd.f32 %v149, %v1171
    %v1173 = vpop.f32.mrb[0].mxu0
    %1174 = vmatprep.mubr.f32.mxu0 0.0
    %1175 = vmatmul.mubr.f32.gmra.mrb[0].mxu0 %v495
    %v1176 = vpop.f32.mrb[0].mxu0
    %v1177 = vadd.f32 %v149, %v1176
    %v1178 = vpop.f32.mrb[0].mxu0
    %1179 = vmatprep.mubr.f32.mxu0 0.0
    %1180 = vmatmul.mubr.f32.gmra.mrb[0].mxu0 %v498
    %v1181 = vpop.f32.mrb[0].mxu0
    %v1182 = vadd.f32 %v149, %v1181
    %v1183 = vpop.f32.mrb[0].mxu0
    %1184 = vmatprep.mubr.f32.mxu0 0.0
    %1185 = vmatmul.mubr.f32.gmra.mrb[0].mxu0 %v501
    %v1186 = vpop.f32.mrb[0].mxu0
    %v1187 = vadd.f32 %v149, %v1186
    %v1188 = vpop.f32.mrb[0].mxu0
    %1189 = vmatprep.mubr.f32.mxu0 0.0
    %1190 = vmatmul.mubr.f32.gmra.mrb[0].mxu0 %v504
    %v1191 = vpop.f32.mrb[0].mxu0
    %v1192 = vadd.f32 %v149, %v1191
    %v1193 = vpop.f32.mrb[0].mxu0
    %1194 = vmatprep.mubr.f32.mxu0 0.0
    %1195 = vmatmul.mubr.f32.gmra.mrb[0].mxu0 %v507
    %v1196 = vpop.f32.mrb[0].mxu0
    %v1197 = vadd.f32 %v149, %v1196
    %v1198 = vpop.f32.mrb[0].mxu0
    %1199 = vmatprep.mubr.f32.mxu0 0.0
    %1200 = vmatmul.mubr.f32.gmra.mrb[0].mxu0 %v510
    %v1201 = vpop.f32.mrb[0].mxu0
    %v1202 = vadd.f32 %v149, %v1201
    %v1203 = vpop.f32.mrb[0].mxu0
    %1204 = vmatprep.mubr.f32.mxu0 0.0
    %1205 = vmatmul.mubr.f32.gmra.mrb[0].mxu0 %v513
    %v1206 = vpop.f32.mrb[0].mxu0
    %v1207 = vadd.f32 %v149, %v1206
    %v1208 = vpop.f32.mrb[0].mxu0
    %1209 = vmatprep.mubr.f32.mxu0 0.0
    %1210 = vmatmul.mubr.f32.gmra.mrb[0].mxu0 %v516
    %v1211 = vpop.f32.mrb[0].mxu0
    %v1212 = vadd.f32 %v149, %v1211
    %v1213 = vpop.f32.mrb[0].mxu0
    %1214 = vmatprep.mubr.f32.mxu0 0.0
    %1215 = vmatmul.mubr.f32.gmra.mrb[0].mxu0 %v519
    %v1216 = vpop.f32.mrb[0].mxu0
    %v1217 = vadd.f32 %v149, %v1216
    %v1218 = vpop.f32.mrb[0].mxu0
    %1219 = vmatprep.mubr.f32.mxu0 0.0
    %1220 = vmatmul.mubr.f32.gmra.mrb[0].mxu0 %v522
    %v1221 = vpop.f32.mrb[0].mxu0
    %v1222 = vadd.f32 %v149, %v1221
    %v1223 = vpop.f32.mrb[0].mxu0
    %1224 = vmatprep.mubr.f32.mxu0 0.0
    %1225 = vmatmul.mubr.f32.gmra.mrb[0].mxu0 %v525
    %v1226 = vpop.f32.mrb[0].mxu0
    %v1227 = vadd.f32 %v149, %v1226
    %v1228 = vpop.f32.mrb[0].mxu0
    %1229 = vmatprep.mubr.f32.mxu0 0.0
    %1230 = vmatmul.mubr.f32.gmra.mrb[0].mxu0 %v528
    %v1231 = vpop.f32.mrb[0].mxu0
    %v1232 = vadd.f32 %v149, %v1231
    %v1233 = vpop.f32.mrb[0].mxu0
    %1234 = vmatprep.mubr.f32.mxu0 0.0
    %1235 = vmatmul.mubr.f32.gmra.mrb[0].mxu0 %v531
    %v1236 = vpop.f32.mrb[0].mxu0
    %v1237 = vadd.f32 %v149, %v1236
    %v1238 = vpop.f32.mrb[0].mxu0
    %1239 = vmatprep.mubr.f32.mxu0 0.0
    %1240 = vmatmul.mubr.f32.gmra.mrb[0].mxu0 %v534
    %v1241 = vpop.f32.mrb[0].mxu0
    %v1242 = vadd.f32 %v149, %v1241
    %v1243 = vpop.f32.mrb[0].mxu0
    %1244 = vdwg.mxu0
    %1245 = vst [vmem:[#allocation2] sm:$0xff] %v607
    %1246 = vst [vmem:[#allocation2 + $0x8] sm:$0xff] %v612
    %1247 = vst [vmem:[#allocation2 + $0x10] sm:$0xff] %v617
    %1248 = vst [vmem:[#allocation2 + $0x18] sm:$0xff] %v622
    %1249 = vst [vmem:[#allocation2 + $0x20] sm:$0xff] %v627
    %1250 = vst [vmem:[#allocation2 + $0x28] sm:$0xff] %v632
    %1251 = vst [vmem:[#allocation2 + $0x30] sm:$0xff] %v637
    %1252 = vst [vmem:[#allocation2 + $0x38] sm:$0xff] %v642
    %1253 = vst [vmem:[#allocation2 + $0x40] sm:$0xff] %v647
    %1254 = vst [vmem:[#allocation2 + $0x48] sm:$0xff] %v652
    %1255 = vst [vmem:[#allocation2 + $0x50] sm:$0xff] %v657
    %1256 = vst [vmem:[#allocation2 + $0x58] sm:$0xff] %v662
    %1257 = vst [vmem:[#allocation2 + $0x60] sm:$0xff] %v667
    %1258 = vst [vmem:[#allocation2 + $0x68] sm:$0xff] %v672
    %1259 = vst [vmem:[#allocation2 + $0x70] sm:$0xff] %v677
    %1260 = vst [vmem:[#allocation2 + $0x78] sm:$0xff] %v682
    %1261 = vst [vmem:[#allocation2 + $0x80] sm:$0xff] %v687
    %1262 = vst [vmem:[#allocation2 + $0x88] sm:$0xff] %v692
    %1263 = vst [vmem:[#allocation2 + $0x90] sm:$0xff] %v697
    %1264 = vst [vmem:[#allocation2 + $0x98] sm:$0xff] %v702
    %1265 = vst [vmem:[#allocation2 + $0xa0] sm:$0xff] %v707
    %1266 = vst [vmem:[#allocation2 + $0xa8] sm:$0xff] %v712
    %1267 = vst [vmem:[#allocation2 + $0xb0] sm:$0xff] %v717
    %1268 = vst [vmem:[#allocation2 + $0xb8] sm:$0xff] %v722
    %1269 = vst [vmem:[#allocation2 + $0xc0] sm:$0xff] %v727
    %1270 = vst [vmem:[#allocation2 + $0xc8] sm:$0xff] %v732
    %1271 = vst [vmem:[#allocation2 + $0xd0] sm:$0xff] %v737
    %1272 = vst [vmem:[#allocation2 + $0xd8] sm:$0xff] %v742
    %1273 = vst [vmem:[#allocation2 + $0xe0] sm:$0xff] %v747
    %1274 = vst [vmem:[#allocation2 + $0xe8] sm:$0xff] %v752
    %1275 = vst [vmem:[#allocation2 + $0xf0] sm:$0xff] %v757
    %1276 = vst [vmem:[#allocation2 + $0xf8] sm:$0xff] %v762
    %1277 = vst [vmem:[#allocation2 + $0x100] sm:$0xff] %v767
    %1278 = vst [vmem:[#allocation2 + $0x108] sm:$0xff] %v772
    %1279 = vst [vmem:[#allocation2 + $0x110] sm:$0xff] %v777
    %1280 = vst [vmem:[#allocation2 + $0x118] sm:$0xff] %v782
    %1281 = vst [vmem:[#allocation2 + $0x120] sm:$0xff] %v787
    %1282 = vst [vmem:[#allocation2 + $0x128] sm:$0xff] %v792
    %1283 = vst [vmem:[#allocation2 + $0x130] sm:$0xff] %v797
    %1284 = vst [vmem:[#allocation2 + $0x138] sm:$0xff] %v802
    %1285 = vst [vmem:[#allocation2 + $0x140] sm:$0xff] %v807
    %1286 = vst [vmem:[#allocation2 + $0x148] sm:$0xff] %v812
    %1287 = vst [vmem:[#allocation2 + $0x150] sm:$0xff] %v817
    %1288 = vst [vmem:[#allocation2 + $0x158] sm:$0xff] %v822
    %1289 = vst [vmem:[#allocation2 + $0x160] sm:$0xff] %v827
    %1290 = vst [vmem:[#allocation2 + $0x168] sm:$0xff] %v832
    %1291 = vst [vmem:[#allocation2 + $0x170] sm:$0xff] %v837
    %1292 = vst [vmem:[#allocation2 + $0x178] sm:$0xff] %v842
    %1293 = vst [vmem:[#allocation2 + $0x180] sm:$0xff] %v847
    %1294 = vst [vmem:[#allocation2 + $0x188] sm:$0xff] %v852
    %1295 = vst [vmem:[#allocation2 + $0x190] sm:$0xff] %v857
    %1296 = vst [vmem:[#allocation2 + $0x198] sm:$0xff] %v862
    %1297 = vst [vmem:[#allocation2 + $0x1a0] sm:$0xff] %v867
    %1298 = vst [vmem:[#allocation2 + $0x1a8] sm:$0xff] %v872
    %1299 = vst [vmem:[#allocation2 + $0x1b0] sm:$0xff] %v877
    %1300 = vst [vmem:[#allocation2 + $0x1b8] sm:$0xff] %v882
    %1301 = vst [vmem:[#allocation2 + $0x1c0] sm:$0xff] %v887
    %1302 = vst [vmem:[#allocation2 + $0x1c8] sm:$0xff] %v892
    %1303 = vst [vmem:[#allocation2 + $0x1d0] sm:$0xff] %v897
    %1304 = vst [vmem:[#allocation2 + $0x1d8] sm:$0xff] %v902
    %1305 = vst [vmem:[#allocation2 + $0x1e0] sm:$0xff] %v907
    %1306 = vst [vmem:[#allocation2 + $0x1e8] sm:$0xff] %v912
    %1307 = vst [vmem:[#allocation2 + $0x1f0] sm:$0xff] %v917
    %1308 = vst [vmem:[#allocation2 + $0x1f8] sm:$0xff] %v922
    %1309 = vst [vmem:[#allocation2 + $0x200] sm:$0xff] %v927
    %1310 = vst [vmem:[#allocation2 + $0x208] sm:$0xff] %v932
    %1311 = vst [vmem:[#allocation2 + $0x210] sm:$0xff] %v937
    %1312 = vst [vmem:[#allocation2 + $0x218] sm:$0xff] %v942
    %1313 = vst [vmem:[#allocation2 + $0x220] sm:$0xff] %v947
    %1314 = vst [vmem:[#allocation2 + $0x228] sm:$0xff] %v952
    %1315 = vst [vmem:[#allocation2 + $0x230] sm:$0xff] %v957
    %1316 = vst [vmem:[#allocation2 + $0x238] sm:$0xff] %v962
    %1317 = vst [vmem:[#allocation2 + $0x240] sm:$0xff] %v967
    %1318 = vst [vmem:[#allocation2 + $0x248] sm:$0xff] %v972
    %1319 = vst [vmem:[#allocation2 + $0x250] sm:$0xff] %v977
    %1320 = vst [vmem:[#allocation2 + $0x258] sm:$0xff] %v982
    %1321 = vst [vmem:[#allocation2 + $0x260] sm:$0xff] %v987
    %1322 = vst [vmem:[#allocation2 + $0x268] sm:$0xff] %v992
    %1323 = vst [vmem:[#allocation2 + $0x270] sm:$0xff] %v997
    %1324 = vst [vmem:[#allocation2 + $0x278] sm:$0xff] %v1002
    %1325 = vst [vmem:[#allocation2 + $0x280] sm:$0xff] %v1007
    %1326 = vst [vmem:[#allocation2 + $0x288] sm:$0xff] %v1012
    %1327 = vst [vmem:[#allocation2 + $0x290] sm:$0xff] %v1017
    %1328 = vst [vmem:[#allocation2 + $0x298] sm:$0xff] %v1022
    %1329 = vst [vmem:[#allocation2 + $0x2a0] sm:$0xff] %v1027
    %1330 = vst [vmem:[#allocation2 + $0x2a8] sm:$0xff] %v1032
    %1331 = vst [vmem:[#allocation2 + $0x2b0] sm:$0xff] %v1037
    %1332 = vst [vmem:[#allocation2 + $0x2b8] sm:$0xff] %v1042
    %1333 = vst [vmem:[#allocation2 + $0x2c0] sm:$0xff] %v1047
    %1334 = vst [vmem:[#allocation2 + $0x2c8] sm:$0xff] %v1052
    %1335 = vst [vmem:[#allocation2 + $0x2d0] sm:$0xff] %v1057
    %1336 = vst [vmem:[#allocation2 + $0x2d8] sm:$0xff] %v1062
    %1337 = vst [vmem:[#allocation2 + $0x2e0] sm:$0xff] %v1067
    %1338 = vst [vmem:[#allocation2 + $0x2e8] sm:$0xff] %v1072
    %1339 = vst [vmem:[#allocation2 + $0x2f0] sm:$0xff] %v1077
    %1340 = vst [vmem:[#allocation2 + $0x2f8] sm:$0xff] %v1082
    %1341 = vst [vmem:[#allocation2 + $0x300] sm:$0xff] %v1087
    %1342 = vst [vmem:[#allocation2 + $0x308] sm:$0xff] %v1092
    %1343 = vst [vmem:[#allocation2 + $0x310] sm:$0xff] %v1097
    %1344 = vst [vmem:[#allocation2 + $0x318] sm:$0xff] %v1102
    %1345 = vst [vmem:[#allocation2 + $0x320] sm:$0xff] %v1107
    %1346 = vst [vmem:[#allocation2 + $0x328] sm:$0xff] %v1112
    %1347 = vst [vmem:[#allocation2 + $0x330] sm:$0xff] %v1117
    %1348 = vst [vmem:[#allocation2 + $0x338] sm:$0xff] %v1122
    %1349 = vst [vmem:[#allocation2 + $0x340] sm:$0xff] %v1127
    %1350 = vst [vmem:[#allocation2 + $0x348] sm:$0xff] %v1132
    %1351 = vst [vmem:[#allocation2 + $0x350] sm:$0xff] %v1137
    %1352 = vst [vmem:[#allocation2 + $0x358] sm:$0xff] %v1142
    %1353 = vst [vmem:[#allocation2 + $0x360] sm:$0xff] %v1147
    %1354 = vst [vmem:[#allocation2 + $0x368] sm:$0xff] %v1152
    %1355 = vst [vmem:[#allocation2 + $0x370] sm:$0xff] %v1157
    %1356 = vst [vmem:[#allocation2 + $0x378] sm:$0xff] %v1162
    %1357 = vst [vmem:[#allocation2 + $0x380] sm:$0xff] %v1167
    %1358 = vst [vmem:[#allocation2 + $0x388] sm:$0xff] %v1172
    %1359 = vst [vmem:[#allocation2 + $0x390] sm:$0xff] %v1177
    %1360 = vst [vmem:[#allocation2 + $0x398] sm:$0xff] %v1182
    %1361 = vst [vmem:[#allocation2 + $0x3a0] sm:$0xff] %v1187
    %1362 = vst [vmem:[#allocation2 + $0x3a8] sm:$0xff] %v1192
    %1363 = vst [vmem:[#allocation2 + $0x3b0] sm:$0xff] %v1197
    %1364 = vst [vmem:[#allocation2 + $0x3b8] sm:$0xff] %v1202
    %1365 = vst [vmem:[#allocation2 + $0x3c0] sm:$0xff] %v1207
    %1366 = vst [vmem:[#allocation2 + $0x3c8] sm:$0xff] %v1212
    %1367 = vst [vmem:[#allocation2 + $0x3d0] sm:$0xff] %v1217
    %1368 = vst [vmem:[#allocation2 + $0x3d8] sm:$0xff] %v1222
    %1369 = vst [vmem:[#allocation2 + $0x3e0] sm:$0xff] %v1227
    %1370 = vst [vmem:[#allocation2 + $0x3e8] sm:$0xff] %v1232
    %1371 = vst [vmem:[#allocation2 + $0x3f0] sm:$0xff] %v1237
    %1372 = vst [vmem:[#allocation2 + $0x3f8] sm:$0xff] %v1242
    // Predicated region
    $region14: #{tpu_custom_call.1} parent=1 // pred_check
      _
    $region15: #{tpu_custom_call.1} parent=1 // pred_check_branch
      %1374 = sbr.rel (0) target = $region17
    $region16: #{tpu_custom_call.1} parent=1 // pred_region
      %s1376 = ssub.s32 16384, 16384
      %1377 = vsyncadd [#allocation3], %s1376
      %s1378 = sshll.u32 [#allocation2], 4
      %s1379 = int_to_ptr.vmem [resolvable:$true] %s1378
      %1384 = dma.vmem_to_hbm [thread:$0]  %s1379, 16384, %s3, [#allocation3], 128, 128, 8
    $region17: #{tpu_custom_call.1} parent=1 // pred_fallthru
      _
    // Predicated region
    $region18: #{tpu_custom_call.1} parent=1 // pred_check
      _
    $region19: #{tpu_custom_call.1} parent=1 // pred_check_branch
      %1386 = sbr.rel (0) target = $region21
    $region20: #{tpu_custom_call.1} parent=1 // pred_region
      %1387 = dma.done [#allocation3], 16384
    $region21: #{tpu_custom_call.1} parent=1 // pred_fallthru
      _
    %1388 = vsyncpa [#allocation3], 1

</llo_original>
